<compile_context>
chip_gen: v7x
topology: tpu7x:2x2x1
jax: 0.10.0
libtpu: 0.0.40
codegen_flags: <defaults>
</compile_context>

<pallas_src>
import jax
import jax.numpy as jnp
from jax.experimental import pallas as pl
from jax.experimental.pallas import tpu as pltpu


def _round_up(x, m):
    return ((x + m - 1) // m) * m


def toy_linear_kernel(x_ref, w1t_ref, w2t_ref, o_ref):
    # h = x @ w1.T ; y = h @ w2.T  -- both already lane-dense (M,K)@(K,N),
    # no transpose materialized inside the kernel.
    h = jnp.dot(x_ref[...], w1t_ref[...], preferred_element_type=jnp.float32)
    y = jnp.dot(h.astype(w2t_ref.dtype), w2t_ref[...],
                preferred_element_type=jnp.float32)
    o_ref[...] = y.astype(o_ref.dtype)


def toy_linear_model(x, w1, w2, *, batch_tile=256, lane_multiple=128,
                     compute_dtype=None):
    """x: (B, in_f), w1: (out_f, in_f), w2: (in_f, out_f) -> (B, in_f)."""
    B, in_f = x.shape
    out_f = w1.shape[0]
    assert w1.shape == (out_f, in_f)
    assert w2.shape == (in_f, out_f)

    out_dtype = x.dtype
    if compute_dtype is not None:
        x, w1, w2 = (a.astype(compute_dtype) for a in (x, w1, w2))

    # Lane-dense padded feature sizes (multiples of 128; use 256 on v7x).
    in_p = _round_up(in_f, lane_multiple)
    out_p = _round_up(out_f, lane_multiple)

    # Batch tile: multiple of 8 sublanes, capped so h = (TB, out_p) f32 stays
    # comfortably in vregs / VMEM between the two matmuls.
    TB = min(batch_tile, _round_up(B, 8))
    B_pad = _round_up(B, TB)

    # Pre-transpose weights once (wrapper-side) and zero-pad everything.
    w1t = jnp.pad(w1.T, ((0, in_p - in_f), (0, out_p - out_f)))   # (in_p, out_p)
    w2t = jnp.pad(w2.T, ((0, out_p - out_f), (0, in_p - in_f)))   # (out_p, in_p)
    xp = jnp.pad(x, ((0, B_pad - B), (0, in_p - in_f)))           # (B_pad, in_p)

    flops = 4 * B * in_f * out_f  # two matmuls, 2*M*K*N each
    bytes_accessed = (xp.size * xp.dtype.itemsize
                      + w1t.size * w1t.dtype.itemsize
                      + w2t.size * w2t.dtype.itemsize
                      + B_pad * in_p * jnp.dtype(out_dtype).itemsize)

    out_padded = pl.pallas_call(
        toy_linear_kernel,
        out_shape=jax.ShapeDtypeStruct((B_pad, in_p), out_dtype),
        grid_spec=pltpu.PrefetchScalarGridSpec(
            num_scalar_prefetch=0,
            grid=(B_pad // TB,),
            in_specs=[
                # x: streamed / double-buffered per batch tile.
                pl.BlockSpec((TB, in_p), lambda i: (i, 0)),
                # w1.T, w2.T: constant index_map -> DMA'd once, VMEM-resident.
                pl.BlockSpec((in_p, out_p), lambda i: (0, 0)),
                pl.BlockSpec((out_p, in_p), lambda i: (0, 0)),
            ],
            out_specs=pl.BlockSpec((TB, in_p), lambda i: (i, 0)),
        ),
        compiler_params=pltpu.CompilerParams(
            # Batch tiles are independent -> shard across TCs (2x on v7x).
            dimension_semantics=("parallel",),
        ),
        cost_estimate=pl.CostEstimate(
            flops=flops, transcendentals=0, bytes_accessed=bytes_accessed),
    )(xp, w1t, w2t)

    # TODO(synk): for very large feature dims, add a K-reduction grid axis with
    # a VMEM f32 accumulator instead of holding whole weights resident (needed
    # to stay within v7x's 64 MiB VMEM); unnecessary at these sizes.
    return out_padded[:B, :in_f]


if __name__ == "__main__":
    # Small shapes consistent with ToyLinearModel(in_features, out_features).
    batch = 8
    in_features = 32
    out_features = 64

    key = jax.random.PRNGKey(0)
    kx, k1, k2 = jax.random.split(key, 3)

    x = jax.random.normal(kx, (batch, in_features), dtype=jnp.float32)
    # Deterministic synthetic weights (PyTorch nn.Linear weight shapes).
    w1 = jax.random.normal(k1, (out_features, in_features), dtype=jnp.float32) * 0.05
    w2 = jax.random.normal(k2, (in_features, out_features), dtype=jnp.float32) * 0.05

    out = jax.block_until_ready(toy_linear_model(x, w1, w2))

    # Reference check in plain JAX.
    ref = (x @ w1.T) @ w2.T
    assert out.shape == (batch, in_features)
    assert jnp.allclose(out, ref, atol=1e-4, rtol=1e-4)

    print("KERNEL_OK")
</pallas_src>

<mosaic_0001>
module attributes {stable_mosaic.version = 11 : i64} {
  func.func @toy_linear_kernel(%arg0: i32, %arg1: memref<8x128xf32, #tpu.memory_space<vmem>>, %arg2: memref<128x128xf32, #tpu.memory_space<vmem>>, %arg3: memref<128x128xf32, #tpu.memory_space<vmem>>, %arg4: memref<8x128xf32, #tpu.memory_space<vmem>>) attributes {dimension_semantics = [#tpu.dimension_semantics<parallel>], iteration_bounds = array<i64: 1>, scalar_prefetch = 0 : i64, scratch_operands = 0 : i64, tpu.core_type = #tpu.core_type<tc>, window_params = [{transform_indices = @transform_0, window_bounds = array<i64: 8, 128>}, {pipeline_mode = #tpu.pipeline_mode<synchronous>, transform_indices = @transform_1, window_bounds = array<i64: 128, 128>}, {pipeline_mode = #tpu.pipeline_mode<synchronous>, transform_indices = @transform_2, window_bounds = array<i64: 128, 128>}, {transform_indices = @transform_3, window_bounds = array<i64: 8, 128>}]} {
    %c0 = arith.constant 0 : index
    %c0_0 = arith.constant 0 : index
    %0 = vector.load %arg1[%c0, %c0_0] : memref<8x128xf32, #tpu.memory_space<vmem>>, vector<8x128xf32>
    %c0_1 = arith.constant 0 : index
    %c0_2 = arith.constant 0 : index
    %1 = vector.load %arg2[%c0_1, %c0_2] : memref<128x128xf32, #tpu.memory_space<vmem>>, vector<128x128xf32>
    %cst = arith.constant dense<0.000000e+00> : vector<8x128xf32>
    %2 = tpu.matmul %0, %1, %cst {dimension_numbers = #tpu.dot_dimension_numbers<[1], [0], [0], [1], [0, 0, 1, 1], [], []>} : vector<8x128xf32>, vector<128x128xf32>, vector<8x128xf32> -> vector<8x128xf32>
    %c0_3 = arith.constant 0 : index
    %c0_4 = arith.constant 0 : index
    %3 = vector.load %arg3[%c0_3, %c0_4] : memref<128x128xf32, #tpu.memory_space<vmem>>, vector<128x128xf32>
    %cst_5 = arith.constant dense<0.000000e+00> : vector<8x128xf32>
    %4 = tpu.matmul %2, %3, %cst_5 {dimension_numbers = #tpu.dot_dimension_numbers<[1], [0], [0], [1], [0, 0, 1, 1], [], []>} : vector<8x128xf32>, vector<128x128xf32>, vector<8x128xf32> -> vector<8x128xf32>
    %c0_6 = arith.constant 0 : index
    %c0_7 = arith.constant 0 : index
    %5 = vector.load %arg4[%c0_6, %c0_7] : memref<8x128xf32, #tpu.memory_space<vmem>>, vector<8x128xf32>
    tpu.vector_store %arg4[%c0_6, %c0_7], %4 {strides = array<i32>} : memref<8x128xf32, #tpu.memory_space<vmem>>, vector<8x128xf32>,
    return
  }
  func.func @transform_0(%arg0: i32) -> (i32, i32) {
    %c0_i32 = arith.constant 0 : i32
    %c0_i32_0 = arith.constant 0 : i32
    return %arg0, %c0_i32 : i32, i32
  }
  func.func @transform_1(%arg0: i32) -> (i32, i32) {
    %c0_i32 = arith.constant 0 : i32
    %c0_i32_0 = arith.constant 0 : i32
    %c0_i32_1 = arith.constant 0 : i32
    return %c0_i32, %c0_i32_0 : i32, i32
  }
  func.func @transform_2(%arg0: i32) -> (i32, i32) {
    %c0_i32 = arith.constant 0 : i32
    %c0_i32_0 = arith.constant 0 : i32
    %c0_i32_1 = arith.constant 0 : i32
    return %c0_i32, %c0_i32_0 : i32, i32
  }
  func.func @transform_3(%arg0: i32) -> (i32, i32) {
    %c0_i32 = arith.constant 0 : i32
    %c0_i32_0 = arith.constant 0 : i32
    return %arg0, %c0_i32 : i32, i32
  }
}

</mosaic_0001>

<llo_original>
// kernel: tpu_custom_call.1
$region0: #{tpu_custom_call.1}
  #allocation0 [shape = 'u32[]', space=smem, size = 0x4, offset = 0x4, fixed_abs, tag = 'smem constant byte address 0x4 - core index']
  #allocation1 [shape = 'u32[144,128]{1,0:T(1,128)}', space=vmem, size = 0x12000, scoped, tag = 'internal scratch']
  %s0 = inlined_call_operand.hbm [shape: f32[8,128], index: 0, kind: input, shape index: {}]
  %s1 = inlined_call_operand.hbm [shape: f32[128,128], index: 1, kind: input, shape index: {}]
  %s2 = inlined_call_operand.hbm [shape: f32[128,128], index: 2, kind: input, shape index: {}]
  %s3 = inlined_call_operand.hbm [shape: f32[8,128], index: 3, kind: output, shape index: {}]
  %s4 = sld [smem:[#allocation0]]
  $region34: #{tpu_custom_call.1} parent=0
    _
  %s6 = ssub.s32 1, %s4
  %s7 = scalar_select 0, %s6, %s4
  $region1: #{tpu_custom_call.1} parent=0
    #allocation2 [shape = 'u8[4096]{0}', space=vmem, size = 0x1000, scoped, tag = 'input window, operand 0, single buffered']
    #allocation3 [shape = 's32[1]{0}', space=sflag, size = 0x4, scoped, tag = 'scoped memory for tpu_custom_call.1']
    #allocation4 [shape = 's32[1]{0}', space=sflag, size = 0x4, scoped, tag = 'scoped memory for tpu_custom_call.1']
    #allocation5 [shape = 'u8[65536]{0}', space=vmem, size = 0x10000, scoped, tag = 'input window, operand 1, single buffered']
    #allocation6 [shape = 's32[1]{0}', space=sflag, size = 0x4, scoped, tag = 'scoped memory for tpu_custom_call.1']
    #allocation7 [shape = 'u8[65536]{0}', space=vmem, size = 0x10000, scoped, tag = 'input window, operand 2, single buffered']
    #allocation8 [shape = 'u8[4096]{0}', space=vmem, size = 0x1000, scoped, tag = 'output window, operand 0, single buffered']
    %8 = vsyncpa [#allocation3], 0
    %9 = vsyncpa [#allocation6], 0
    %10 = vsyncpa [#allocation4], 0
    // Predicated region
    $region2: #{tpu_custom_call.1} parent=1 // pred_check
      _
    $region3: #{tpu_custom_call.1} parent=1 // pred_check_branch
      %12 = sbr.rel (0) target = $region5
    $region4: #{tpu_custom_call.1} parent=1 // pred_region
      %s14 = ssub.s32 128, 128
      %15 = vsyncadd [#allocation3], %s14
      %s17 = sshll.u32 [#allocation2], 4
      %s18 = int_to_ptr.vmem [resolvable:$true] %s17
      %20 = dma.hbm_to_vmem [thread:$0]  %s0, 128, %s18, [#allocation3]
    $region5: #{tpu_custom_call.1} parent=1 // pred_fallthru
      _
    // Predicated region
    $region6: #{tpu_custom_call.1} parent=1 // pred_check
      _
    $region7: #{tpu_custom_call.1} parent=1 // pred_check_branch
      %22 = sbr.rel (0) target = $region9
    $region8: #{tpu_custom_call.1} parent=1 // pred_region
      %s24 = ssub.s32 2048, 2048
      %25 = vsyncadd [#allocation6], %s24
      %s26 = sshll.u32 [#allocation5], 4
      %s27 = int_to_ptr.vmem [resolvable:$true] %s26
      %32 = dma.hbm_to_vmem [thread:$0]  %s1, 2048, %s27, [#allocation6], 128, 128, 8
    $region9: #{tpu_custom_call.1} parent=1 // pred_fallthru
      _
    // Predicated region
    $region10: #{tpu_custom_call.1} parent=1 // pred_check
      _
    $region11: #{tpu_custom_call.1} parent=1 // pred_check_branch
      %34 = sbr.rel (0) target = $region13
    $region12: #{tpu_custom_call.1} parent=1 // pred_region
      %s36 = ssub.s32 2048, 2048
      %37 = vsyncadd [#allocation6], %s36
      %s38 = sshll.u32 [#allocation7], 4
      %s39 = int_to_ptr.vmem [resolvable:$true] %s38
      %44 = dma.hbm_to_vmem [thread:$0]  %s2, 2048, %s39, [#allocation6], 128, 128, 8
    $region13: #{tpu_custom_call.1} parent=1 // pred_fallthru
      _
    // Predicated region
    $region14: #{tpu_custom_call.1} parent=1 // pred_check
      _
    $region15: #{tpu_custom_call.1} parent=1 // pred_check_branch
      %46 = sbr.rel (0) target = $region17
    $region16: #{tpu_custom_call.1} parent=1 // pred_region
      %47 = dma.done [#allocation3], 128
    $region17: #{tpu_custom_call.1} parent=1 // pred_fallthru
      _
    // Predicated region
    $region18: #{tpu_custom_call.1} parent=1 // pred_check
      _
    $region19: #{tpu_custom_call.1} parent=1 // pred_check_branch
      %49 = sbr.rel (0) target = $region21
    $region20: #{tpu_custom_call.1} parent=1 // pred_region
      %50 = dma.done [#allocation6], 2048
    $region21: #{tpu_custom_call.1} parent=1 // pred_fallthru
      _
    // Predicated region
    $region22: #{tpu_custom_call.1} parent=1 // pred_check
      _
    $region23: #{tpu_custom_call.1} parent=1 // pred_check_branch
      %52 = sbr.rel (0) target = $region25
    $region24: #{tpu_custom_call.1} parent=1 // pred_region
      %53 = dma.done [#allocation6], 2048
    $region25: #{tpu_custom_call.1} parent=1 // pred_fallthru
      _
    %v54 = vld [vmem:[#allocation2] sm:$0xff]
    %v55 = vld [vmem:[#allocation5] sm:$0xff]
    %v56 = vld [vmem:[#allocation5 + $0x8] sm:$0xff]
    %v57 = vld [vmem:[#allocation5 + $0x10] sm:$0xff]
    %v58 = vld [vmem:[#allocation5 + $0x18] sm:$0xff]
    %v59 = vld [vmem:[#allocation5 + $0x20] sm:$0xff]
    %v60 = vld [vmem:[#allocation5 + $0x28] sm:$0xff]
    %v61 = vld [vmem:[#allocation5 + $0x30] sm:$0xff]
    %v62 = vld [vmem:[#allocation5 + $0x38] sm:$0xff]
    %v63 = vld [vmem:[#allocation5 + $0x40] sm:$0xff]
    %v64 = vld [vmem:[#allocation5 + $0x48] sm:$0xff]
    %v65 = vld [vmem:[#allocation5 + $0x50] sm:$0xff]
    %v66 = vld [vmem:[#allocation5 + $0x58] sm:$0xff]
    %v67 = vld [vmem:[#allocation5 + $0x60] sm:$0xff]
    %v68 = vld [vmem:[#allocation5 + $0x68] sm:$0xff]
    %v69 = vld [vmem:[#allocation5 + $0x70] sm:$0xff]
    %v70 = vld [vmem:[#allocation5 + $0x78] sm:$0xff]
    %71 = vmatprep.subr.mxu0 0.0
    %72 = vmatpush1.msra.mxu0 %v55
    %73 = vmatprep.subr.mxu0 0.0
    %74 = vmatpush1.msra.mxu0 %v56
    %75 = vmatprep.subr.mxu0 0.0
    %76 = vmatpush1.msra.mxu0 %v57
    %77 = vmatprep.subr.mxu0 0.0
    %78 = vmatpush1.msra.mxu0 %v58
    %79 = vmatprep.subr.mxu0 0.0
    %80 = vmatpush1.msra.mxu0 %v59
    %81 = vmatprep.subr.mxu0 0.0
    %82 = vmatpush1.msra.mxu0 %v60
    %83 = vmatprep.subr.mxu0 0.0
    %84 = vmatpush1.msra.mxu0 %v61
    %85 = vmatprep.subr.mxu0 0.0
    %86 = vmatpush1.msra.mxu0 %v62
    %87 = vmatprep.subr.mxu0 0.0
    %88 = vmatpush1.msra.mxu0 %v63
    %89 = vmatprep.subr.mxu0 0.0
    %90 = vmatpush1.msra.mxu0 %v64
    %91 = vmatprep.subr.mxu0 0.0
    %92 = vmatpush1.msra.mxu0 %v65
    %93 = vmatprep.subr.mxu0 0.0
    %94 = vmatpush1.msra.mxu0 %v66
    %95 = vmatprep.subr.mxu0 0.0
    %96 = vmatpush1.msra.mxu0 %v67
    %97 = vmatprep.subr.mxu0 0.0
    %98 = vmatpush1.msra.mxu0 %v68
    %99 = vmatprep.subr.mxu0 0.0
    %100 = vmatpush1.msra.mxu0 %v69
    %101 = vmatprep.subr.mxu0 0.0
    %102 = vmatpush1.msra.mxu0 %v70
    %103 = vmatprep.subr.mxu0 0.0
    %104 = vmatpush1.msra.mxu0 0.0
    %105 = vmatprep.subr.mxu0 0.0
    %106 = vmatpush1.msra.mxu0 0.0
    %107 = vmatprep.subr.mxu0 0.0
    %108 = vmatpush1.msra.mxu0 0.0
    %109 = vmatprep.subr.mxu0 0.0
    %110 = vmatpush1.msra.mxu0 0.0
    %111 = vmatprep.subr.mxu0 0.0
    %112 = vmatpush1.msra.mxu0 0.0
    %113 = vmatprep.subr.mxu0 0.0
    %114 = vmatpush1.msra.mxu0 0.0
    %115 = vmatprep.subr.mxu0 0.0
    %116 = vmatpush1.msra.mxu0 0.0
    %117 = vmatprep.subr.mxu0 0.0
    %118 = vmatpush1.msra.mxu0 0.0
    %119 = vmatprep.subr.mxu0 0.0
    %120 = vmatpush1.msra.mxu0 0.0
    %121 = vmatprep.subr.mxu0 0.0
    %122 = vmatpush1.msra.mxu0 0.0
    %123 = vmatprep.subr.mxu0 0.0
    %124 = vmatpush1.msra.mxu0 0.0
    %125 = vmatprep.subr.mxu0 0.0
    %126 = vmatpush1.msra.mxu0 0.0
    %127 = vmatprep.subr.mxu0 0.0
    %128 = vmatpush1.msra.mxu0 0.0
    %129 = vmatprep.subr.mxu0 0.0
    %130 = vmatpush1.msra.mxu0 0.0
    %131 = vmatprep.subr.mxu0 0.0
    %132 = vmatpush1.msra.mxu0 0.0
    %133 = vmatprep.subr.mxu0 0.0
    %134 = vmatpush1.msra.mxu0 0.0
    %135 = vmatprep.mubr.f32.mxu0 0.0
    %136 = vmatmul.mubr.f32.gmra.mrb[0].mxu0 %v54
    %v137 = vpop.f32.mrb[0].mxu0
    %v138 = vadd.f32 0.0, %v137
    %v139 = vpop.f32.mrb[0].mxu0
    %140 = vdwg.mxu0
    %v141 = vld [vmem:[#allocation7] sm:$0xff]
    %v142 = vld [vmem:[#allocation7 + $0x8] sm:$0xff]
    %v143 = vld [vmem:[#allocation7 + $0x10] sm:$0xff]
    %v144 = vld [vmem:[#allocation7 + $0x18] sm:$0xff]
    %v145 = vld [vmem:[#allocation7 + $0x20] sm:$0xff]
    %v146 = vld [vmem:[#allocation7 + $0x28] sm:$0xff]
    %v147 = vld [vmem:[#allocation7 + $0x30] sm:$0xff]
    %v148 = vld [vmem:[#allocation7 + $0x38] sm:$0xff]
    %v149 = vld [vmem:[#allocation7 + $0x40] sm:$0xff]
    %v150 = vld [vmem:[#allocation7 + $0x48] sm:$0xff]
    %v151 = vld [vmem:[#allocation7 + $0x50] sm:$0xff]
    %v152 = vld [vmem:[#allocation7 + $0x58] sm:$0xff]
    %v153 = vld [vmem:[#allocation7 + $0x60] sm:$0xff]
    %v154 = vld [vmem:[#allocation7 + $0x68] sm:$0xff]
    %v155 = vld [vmem:[#allocation7 + $0x70] sm:$0xff]
    %v156 = vld [vmem:[#allocation7 + $0x78] sm:$0xff]
    %157 = vmatprep.subr.mxu0 0.0
    %158 = vmatpush1.msra.mxu0 %v141
    %159 = vmatprep.subr.mxu0 0.0
    %160 = vmatpush1.msra.mxu0 %v142
    %161 = vmatprep.subr.mxu0 0.0
    %162 = vmatpush1.msra.mxu0 %v143
    %163 = vmatprep.subr.mxu0 0.0
    %164 = vmatpush1.msra.mxu0 %v144
    %165 = vmatprep.subr.mxu0 0.0
    %166 = vmatpush1.msra.mxu0 %v145
    %167 = vmatprep.subr.mxu0 0.0
    %168 = vmatpush1.msra.mxu0 %v146
    %169 = vmatprep.subr.mxu0 0.0
    %170 = vmatpush1.msra.mxu0 %v147
    %171 = vmatprep.subr.mxu0 0.0
    %172 = vmatpush1.msra.mxu0 %v148
    %173 = vmatprep.subr.mxu0 0.0
    %174 = vmatpush1.msra.mxu0 %v149
    %175 = vmatprep.subr.mxu0 0.0
    %176 = vmatpush1.msra.mxu0 %v150
    %177 = vmatprep.subr.mxu0 0.0
    %178 = vmatpush1.msra.mxu0 %v151
    %179 = vmatprep.subr.mxu0 0.0
    %180 = vmatpush1.msra.mxu0 %v152
    %181 = vmatprep.subr.mxu0 0.0
    %182 = vmatpush1.msra.mxu0 %v153
    %183 = vmatprep.subr.mxu0 0.0
    %184 = vmatpush1.msra.mxu0 %v154
    %185 = vmatprep.subr.mxu0 0.0
    %186 = vmatpush1.msra.mxu0 %v155
    %187 = vmatprep.subr.mxu0 0.0
    %188 = vmatpush1.msra.mxu0 %v156
    %189 = vmatprep.subr.mxu0 0.0
    %190 = vmatpush1.msra.mxu0 0.0
    %191 = vmatprep.subr.mxu0 0.0
    %192 = vmatpush1.msra.mxu0 0.0
    %193 = vmatprep.subr.mxu0 0.0
    %194 = vmatpush1.msra.mxu0 0.0
    %195 = vmatprep.subr.mxu0 0.0
    %196 = vmatpush1.msra.mxu0 0.0
    %197 = vmatprep.subr.mxu0 0.0
    %198 = vmatpush1.msra.mxu0 0.0
    %199 = vmatprep.subr.mxu0 0.0
    %200 = vmatpush1.msra.mxu0 0.0
    %201 = vmatprep.subr.mxu0 0.0
    %202 = vmatpush1.msra.mxu0 0.0
    %203 = vmatprep.subr.mxu0 0.0
    %204 = vmatpush1.msra.mxu0 0.0
    %205 = vmatprep.subr.mxu0 0.0
    %206 = vmatpush1.msra.mxu0 0.0
    %207 = vmatprep.subr.mxu0 0.0
    %208 = vmatpush1.msra.mxu0 0.0
    %209 = vmatprep.subr.mxu0 0.0
    %210 = vmatpush1.msra.mxu0 0.0
    %211 = vmatprep.subr.mxu0 0.0
    %212 = vmatpush1.msra.mxu0 0.0
    %213 = vmatprep.subr.mxu0 0.0
    %214 = vmatpush1.msra.mxu0 0.0
    %215 = vmatprep.subr.mxu0 0.0
    %216 = vmatpush1.msra.mxu0 0.0
    %217 = vmatprep.subr.mxu0 0.0
    %218 = vmatpush1.msra.mxu0 0.0
    %219 = vmatprep.subr.mxu0 0.0
    %220 = vmatpush1.msra.mxu0 0.0
    %221 = vmatprep.mubr.f32.mxu0 0.0
    %222 = vmatmul.mubr.f32.gmra.mrb[0].mxu0 %v138
    %v223 = vpop.f32.mrb[0].mxu0
    %v224 = vadd.f32 0.0, %v223
    %v225 = vpop.f32.mrb[0].mxu0
    %226 = vdwg.mxu0
    %227 = vst [vmem:[#allocation8] sm:$0xff] %v224
    // Predicated region
    $region26: #{tpu_custom_call.1} parent=1 // pred_check
      _
    $region27: #{tpu_custom_call.1} parent=1 // pred_check_branch
      %229 = sbr.rel (0) target = $region29
    $region28: #{tpu_custom_call.1} parent=1 // pred_region
      %s231 = ssub.s32 128, 128
      %232 = vsyncadd [#allocation4], %s231
      %s234 = sshll.u32 [#allocation8], 4
      %s235 = int_to_ptr.vmem [resolvable:$true] %s234
      %237 = dma.vmem_to_hbm [thread:$0]  %s235, 128, %s3, [#allocation4]
    $region29: #{tpu_custom_call.1} parent=1 // pred_fallthru
      _
    // Predicated region
    $region30: #{tpu_custom_call.1} parent=1 // pred_check
      _
    $region31: #{tpu_custom_call.1} parent=1 // pred_check_branch
      %239 = sbr.rel (0) target = $region33
    $region32: #{tpu_custom_call.1} parent=1 // pred_region
      %240 = dma.done [#allocation4], 128
    $region33: #{tpu_custom_call.1} parent=1 // pred_fallthru
      _
    %241 = vsyncpa [#allocation3], 1
    %242 = vsyncpa [#allocation6], 1
    %243 = vsyncpa [#allocation4], 1

</llo_original>
